<compile_context>
chip_gen: v6e
topology: v6e:2x2x1
jax: 0.10.0
libtpu: 0.0.40
codegen_flags: <defaults>
</compile_context>

<pallas_src>
import math
import functools

import jax
import jax.numpy as jnp
from jax.experimental import pallas as pl
from jax.experimental.pallas import tpu as pltpu

MAX_SPARSITY = 0.25
MIN_SPARSITY = 0.001  # unused by forward(); kept for parity with the module


def _round_up(x: int, m: int) -> int:
    return ((x + m - 1) // m) * m


def _sparsity_predictor_kernel(x_ref, w_ref, o_ref, *, max_sparsity: float):
    """x_ref: (TB, D) native dtype, w_ref: (1, D), o_ref: (1, TB) f32."""
    x = x_ref[...].astype(jnp.float32)            # (TB, D)  in-kernel cast
    w = w_ref[...].astype(jnp.float32)            # (1, D)   broadcast over rows
    logits = jnp.sum(x * w, axis=-1)              # (TB,)    VPU mul + XLU reduce
    e = jnp.exp(-logits)                          # EUP
    sig = pl.reciprocal(1.0 + e, approx=True)     # EUP recip (frees VALU divide)
    o_ref[...] = (sig * jnp.float32(max_sparsity))[None, :]   # lane-dense (1, TB)


def sparsity_predictor_forward(x: jax.Array,
                               weight: jax.Array,
                               max_sparsity: float = MAX_SPARSITY) -> jax.Array:
    """sigmoid(x @ weight.T) * max_sparsity, squeezed (SparsityPredictor.forward).

    x:      (B, D) float array (any float dtype; math is done in f32)
    weight: (1, D) float array (== nn.Linear(D, 1, bias=False).weight)
    """
    B, D = x.shape
    assert weight.shape == (1, D), f"weight shape {weight.shape} != (1, {D})"

    # Batch tile sizing: ~4 MiB per input buffer (Pallas double-buffers it),
    # safe on every generation with the explicit 40 MiB vmem limit below.
    itemsize = jnp.dtype(x.dtype).itemsize
    budget_bytes = 4 * 1024 * 1024
    tb = budget_bytes // max(1, D * itemsize)
    tb = max(8, (tb // 8) * 8)

    if B < 8:
        # Block dim == full array dim -> allowed, and no ragged edge at all.
        tb = B
    else:
        # Keep block shape <= array shape; only the last tile is ragged.
        tb = min(tb, (B // 8) * 8)
        # v7x megacore: prefer >= 2 batch tiles when there is enough work so
        # dimension_semantics=("parallel",) can split across both TensorCores.
        if B >= 4096 and (B + tb - 1) // tb < 2:
            tb = max(8, _round_up((B + 1) // 2, 8))

    num_tiles = (B + tb - 1) // tb

    out_tiles = pl.pallas_call(
        functools.partial(_sparsity_predictor_kernel,
                          max_sparsity=float(max_sparsity)),
        out_shape=jax.ShapeDtypeStruct((num_tiles, tb), jnp.float32),
        grid_spec=pltpu.PrefetchScalarGridSpec(
            num_scalar_prefetch=0,
            grid=(num_tiles,),
            in_specs=[
                pl.BlockSpec((tb, D), lambda i: (i, 0)),   # batch tile of x (native dtype)
                pl.BlockSpec((1, D), lambda i: (0, 0)),    # weight row (resident)
            ],
            out_specs=pl.BlockSpec((1, tb), lambda i: (i, 0)),  # lane-dense writeback
        ),
        compiler_params=pltpu.CompilerParams(
            dimension_semantics=("parallel",),
            vmem_limit_bytes=40 * 1024 * 1024,
        ),
    )(x, weight)

    out = out_tiles.reshape(-1)[:B]
    # torch .squeeze(): (B, 1) -> (B,), and additionally () when B == 1
    if B == 1:
        out = out.reshape(())
    return out


def _reference(x: jax.Array, weight: jax.Array, max_sparsity: float) -> jax.Array:
    """Pure-JAX reference mirroring the PyTorch forward."""
    logits = x.astype(jnp.float32) @ weight.astype(jnp.float32).T   # (B, 1)
    sig = 1.0 / (1.0 + jnp.exp(-logits))
    return jnp.squeeze(sig * jnp.float32(max_sparsity))


if __name__ == "__main__":
    # Small shape consistent with the module: batch=2, in_features(hidden)=32
    B, D = 2, 32
    key = jax.random.PRNGKey(0)
    kx, kw = jax.random.split(key)
    x = jax.random.normal(kx, (B, D), dtype=jnp.float32)
    bound = 1.0 / math.sqrt(D)  # nn.Linear default init range
    weight = jax.random.uniform(kw, (1, D), jnp.float32, -bound, bound)

    out = sparsity_predictor_forward(x, weight, MAX_SPARSITY)
    out = jax.block_until_ready(out)

    ref = _reference(x, weight, MAX_SPARSITY)
    assert out.shape == (B,) and out.dtype == jnp.float32
    assert jnp.allclose(out, ref, rtol=1e-2, atol=1e-4), (out, ref)
    # sanity: sigmoid * max_sparsity stays in (0, max_sparsity)
    assert bool(jnp.all(out > 0.0)) and bool(jnp.all(out < MAX_SPARSITY))

    # Second check: ragged batch (B not a multiple of the tile) + bf16 streaming
    # (no wrapper upcast; cast happens inside the kernel).
    B2 = 10
    kx2, kw2 = jax.random.split(jax.random.PRNGKey(1))
    x2 = jax.random.normal(kx2, (B2, D), dtype=jnp.float32).astype(jnp.bfloat16)
    w2 = jax.random.uniform(kw2, (1, D), jnp.float32, -bound, bound)
    out2 = jax.block_until_ready(sparsity_predictor_forward(x2, w2, MAX_SPARSITY))
    ref2 = _reference(x2, w2, MAX_SPARSITY)
    assert out2.shape == (B2,)
    assert jnp.allclose(out2, ref2, rtol=1e-2, atol=1e-4), (out2, ref2)

    print("KERNEL_OK")
</pallas_src>

<mosaic_0001>
module attributes {stable_mosaic.version = 11 : i64} {
  func.func @_sparsity_predictor_kernel(%arg0: i32, %arg1: memref<2x32xf32, #tpu.memory_space<vmem>>, %arg2: memref<1x32xf32, #tpu.memory_space<vmem>>, %arg3: memref<1x2xf32, #tpu.memory_space<vmem>>) attributes {dimension_semantics = [#tpu.dimension_semantics<parallel>], iteration_bounds = array<i64: 1>, scalar_prefetch = 0 : i64, scratch_operands = 0 : i64, tpu.core_type = #tpu.core_type<tc>, window_params = [{transform_indices = @transform_0, window_bounds = array<i64: 2, 32>}, {pipeline_mode = #tpu.pipeline_mode<synchronous>, transform_indices = @transform_1, window_bounds = array<i64: 1, 32>}, {transform_indices = @transform_2, window_bounds = array<i64: 1, 2>}]} {
    %c0 = arith.constant 0 : index
    %c0_0 = arith.constant 0 : index
    %0 = vector.load %arg1[%c0, %c0_0] : memref<2x32xf32, #tpu.memory_space<vmem>>, vector<2x32xf32>
    %c0_1 = arith.constant 0 : index
    %c0_2 = arith.constant 0 : index
    %1 = vector.load %arg2[%c0_1, %c0_2] : memref<1x32xf32, #tpu.memory_space<vmem>>, vector<1x32xf32>
    %2 = vector.broadcast %1 : vector<1x32xf32> to vector<2x32xf32>
    %3 = arith.mulf %0, %2 : vector<2x32xf32>
    %cst = arith.constant dense<0.000000e+00> : vector<2xf32>
    %4 = vector.multi_reduction <add>, %3, %cst [1] : vector<2x32xf32> to vector<2xf32>
    %cst_3 = arith.constant 0.000000e+00 : f32
    %5 = vector.broadcast %cst_3 : f32 to vector<2xf32>
    %6 = arith.subf %5, %4 : vector<2xf32>
    %7 = math.exp %6 : vector<2xf32>
    %cst_4 = arith.constant 1.000000e+00 : f32
    %8 = vector.broadcast %cst_4 : f32 to vector<2xf32>
    %9 = arith.addf %8, %7 : vector<2xf32>
    %10 = tpu.reciprocal %9 {approx = true} : vector<2xf32> -> vector<2xf32>
    %cst_5 = arith.constant 2.500000e-01 : f32
    %11 = vector.broadcast %cst_5 : f32 to vector<2xf32>
    %12 = arith.mulf %10, %11 : vector<2xf32>
    %13 = vector.shape_cast %12 : vector<2xf32> to vector<1x2xf32>
    %c0_6 = arith.constant 0 : index
    %c0_7 = arith.constant 0 : index
    %14 = vector.load %arg3[%c0_6, %c0_7] : memref<1x2xf32, #tpu.memory_space<vmem>>, vector<1x2xf32>
    tpu.vector_store %arg3[%c0_6, %c0_7], %13 {strides = array<i32>} : memref<1x2xf32, #tpu.memory_space<vmem>>, vector<1x2xf32>,
    return
  }
  func.func @transform_0(%arg0: i32) -> (i32, i32) {
    %c0_i32 = arith.constant 0 : i32
    %c0_i32_0 = arith.constant 0 : i32
    return %arg0, %c0_i32 : i32, i32
  }
  func.func @transform_1(%arg0: i32) -> (i32, i32) {
    %c0_i32 = arith.constant 0 : i32
    %c0_i32_0 = arith.constant 0 : i32
    %c0_i32_1 = arith.constant 0 : i32
    return %c0_i32, %c0_i32_0 : i32, i32
  }
  func.func @transform_2(%arg0: i32) -> (i32, i32) {
    %c0_i32 = arith.constant 0 : i32
    %c0_i32_0 = arith.constant 0 : i32
    return %arg0, %c0_i32 : i32, i32
  }
}

</mosaic_0001>

<llo_original>
// kernel: tpu_custom_call.1
$region0: #{tpu_custom_call.1}
  #allocation0 [shape = 'u32[]', space=smem, size = 0x4, offset = 0x4, fixed_abs, tag = 'smem constant byte address 0x4 - core index']
  #allocation1 [shape = 'u32[144,128]{1,0:T(1,128)}', space=vmem, size = 0x12000, scoped, tag = 'internal scratch']
  %s0 = inlined_call_operand.hbm [shape: f32[2,32], index: 0, kind: input, shape index: {}]
  %s1 = inlined_call_operand.vmem [shape: f32[1,32], index: 1, kind: input, shape index: {}]
  %s2 = inlined_call_operand.hbm [shape: f32[1,2], index: 2, kind: output, shape index: {}]
  %s3 = sld [smem:[#allocation0]]
  $region22: #{tpu_custom_call.1} parent=0
    _
  %s5 = ssub.s32 1, %s3
  %s6 = scalar_select 0, %s5, %s3
  $region1: #{tpu_custom_call.1} parent=0
    #allocation2 [shape = 'u8[1024]{0}', space=vmem, size = 0x400, scoped, tag = 'input window, operand 0, single buffered']
    #allocation3 [shape = 's32[1]{0}', space=sflag, size = 0x4, scoped, tag = 'scoped memory for tpu_custom_call.1']
    #allocation4 [shape = 's32[1]{0}', space=sflag, size = 0x4, scoped, tag = 'scoped memory for tpu_custom_call.1']
    #allocation5 [shape = 'u8[512]{0}', space=vmem, size = 0x400, scoped, tag = 'output window, operand 0, single buffered']
    %7 = vsyncpa [#allocation3], 0
    %8 = vsyncpa [#allocation4], 0
    // Predicated region
    $region2: #{tpu_custom_call.1} parent=1 // pred_check
      _
    $region3: #{tpu_custom_call.1} parent=1 // pred_check_branch
      %10 = sbr.rel (0) target = $region5
    $region4: #{tpu_custom_call.1} parent=1 // pred_region
      %s12 = ssub.s32 32, 32
      %13 = vsyncadd [#allocation3], %s12
      %s15 = sshll.u32 [#allocation2], 4
      %s16 = int_to_ptr.vmem [resolvable:$true] %s15
      %18 = dma.hbm_to_vmem [thread:$0]  %s0, 32, %s16, [#allocation3]
    $region5: #{tpu_custom_call.1} parent=1 // pred_fallthru
      _
    // Predicated region
    $region6: #{tpu_custom_call.1} parent=1 // pred_check
      _
    $region7: #{tpu_custom_call.1} parent=1 // pred_check_branch
      %20 = sbr.rel (0) target = $region9
    $region8: #{tpu_custom_call.1} parent=1 // pred_region
      _
    $region9: #{tpu_custom_call.1} parent=1 // pred_fallthru
      _
    // Predicated region
    $region10: #{tpu_custom_call.1} parent=1 // pred_check
      _
    $region11: #{tpu_custom_call.1} parent=1 // pred_check_branch
      %22 = sbr.rel (0) target = $region13
    $region12: #{tpu_custom_call.1} parent=1 // pred_region
      %23 = dma.done [#allocation3], 32
    $region13: #{tpu_custom_call.1} parent=1 // pred_fallthru
      _
    %v24 = vld [vmem:[#allocation2] sm:$0x3]
    %v25 = vld [vmem:[%s1] sm:$0x1]
    %v27 = vlaneseq
    %v28 = vshrl.u32 %v27, 7
    %v29 = vsub.s32 0, %v28
    %v30 = vrot.slane %v25, %v29
    %v32 = vmul.f32 %v24, %v30
    %vm33 = vcmask 254976
    %v34 = vsel %vm33, %v32, 0.0
    %35 = vadd.xlane.f32.xlu0 %v34
    %v36 = vpop.xlane.xlu0 %35
    %v37 = vsub.f32 0.0, %v36
    %v38 = vmul.f32 %v37, 1.442695
    %v39 = vpow.pop %v38
    %v40 = vadd.f32 %v39, 1.0
    %v41 = vrcp.pop %v40
    %v42 = vmul.f32 %v41, 0.25
    %v44 = vlaneseq
    %v45 = vand.u32 %v44, 127
    %v46 = vlaneseq
    %v47 = vshrl.u32 %v46, 7
    %v48 = vsub.s32 %v45, %v47
    %v49 = vrot.slane %v42, %v48
    %vm51 = vcmask 8192
    %52 = vst.msk [vmem:[#allocation5] sm:$0x1] %vm51, %v49
    // Predicated region
    $region14: #{tpu_custom_call.1} parent=1 // pred_check
      _
    $region15: #{tpu_custom_call.1} parent=1 // pred_check_branch
      %54 = sbr.rel (0) target = $region17
    $region16: #{tpu_custom_call.1} parent=1 // pred_region
      %s56 = ssub.s32 16, 16
      %57 = vsyncadd [#allocation4], %s56
      %s59 = sshll.u32 [#allocation5], 4
      %s60 = int_to_ptr.vmem [resolvable:$true] %s59
      %62 = dma.vmem_to_hbm [thread:$0]  %s60, 16, %s2, [#allocation4]
    $region17: #{tpu_custom_call.1} parent=1 // pred_fallthru
      _
    // Predicated region
    $region18: #{tpu_custom_call.1} parent=1 // pred_check
      _
    $region19: #{tpu_custom_call.1} parent=1 // pred_check_branch
      %64 = sbr.rel (0) target = $region21
    $region20: #{tpu_custom_call.1} parent=1 // pred_region
      %65 = dma.done [#allocation4], 16
    $region21: #{tpu_custom_call.1} parent=1 // pred_fallthru
      _
    %66 = vsyncpa [#allocation3], 1
    %67 = vsyncpa [#allocation4], 1

</llo_original>
